<compile_context>
chip_gen: v6e
topology: v6e:2x2x1
jax: 0.10.0
libtpu: 0.0.40
codegen_flags: <defaults>
</compile_context>

<pallas_src>
import jax
import jax.numpy as jnp
from jax.experimental import pallas as pl
from jax.experimental.pallas import tpu as pltpu


def _sxf_linear3d_kernel(x_ref, w_ref, b_ref, o_ref):
    # x_ref: (C, TT, WH)   one batch element, one tile of TT time-steps (NCDHW layout, no HBM transpose)
    # w_ref: (C, WH, OP)   fused constrained weight, output dim zero-padded to OP (multiple of 128)
    # b_ref: (1, OP)       bias (zero-padded)
    # o_ref: (TT, OP)      lane-dense output tile
    C = x_ref.shape[0]
    acc = jnp.dot(x_ref[0], w_ref[0], preferred_element_type=jnp.float32)
    for ci in range(1, C):  # small static channel count; leading-dim slices are contiguous
        acc = acc + jnp.dot(x_ref[ci], w_ref[ci], preferred_element_type=jnp.float32)
    o_ref[...] = (acc + b_ref[...]).astype(o_ref.dtype)


def spatial_x_feature_linear3d(x, spatial, features, bias=None, *, positive=True, normalize=False):
    """x: (N, c, t, w, h); spatial: (outdims,1,1,w,h); features: (outdims,c,1,1,1); bias: (outdims,)."""
    N, c, t, w, h = x.shape
    outdims = spatial.shape[0]
    wh = w * h
    OP = ((outdims + 127) // 128) * 128  # pad output units to a lane-dense multiple of 128

    # ---- constrained, fused weight: computed once (outside the grid loop) ----
    sp = spatial.reshape(outdims, wh).astype(jnp.float32)
    ft = features.reshape(outdims, c).astype(jnp.float32)
    if positive:
        sp = jnp.maximum(sp, 0.0)
        ft = jnp.maximum(ft, 0.0)
    if normalize:
        # per-output-unit L2 norm over the spatial footprint, eps added after sqrt (matches torch impl)
        norm = jnp.sqrt(jnp.sum(sp * sp, axis=-1, keepdims=True))
        sp = sp / (norm + 1e-6)
    wgt = ft[:, :, None] * sp[:, None, :]                       # (O, C, WH)
    wgt = jnp.transpose(wgt, (1, 2, 0))                         # (C, WH, O)
    wgt = jnp.pad(wgt, ((0, 0), (0, 0), (0, OP - outdims))).astype(x.dtype)

    if bias is None:
        b = jnp.zeros((1, OP), jnp.float32)
    else:
        b = jnp.pad(bias.reshape(1, outdims).astype(jnp.float32), ((0, 0), (0, OP - outdims)))

    # Trailing-dim merge only (no transpose, no extra HBM pass over x).
    x4 = x.reshape(N, c, t, wh)

    # Time-tile: full t when small; otherwise 512 rows (multiple of 8, modest VMEM footprint on
    # all generations: c*TT*wh f32 @ demo-like c*wh=1024 -> 2 MiB/buffer, double-buffered 4 MiB).
    TT = t if t <= 512 else 512
    grid = (N, pl.cdiv(t, TT))

    cost = pl.CostEstimate(
        flops=2 * N * t * c * wh * OP,
        transcendentals=0,
        bytes_accessed=(x4.size * x4.dtype.itemsize
                        + wgt.size * wgt.dtype.itemsize
                        + N * t * OP * 4),
    )

    out = pl.pallas_call(
        _sxf_linear3d_kernel,
        out_shape=jax.ShapeDtypeStruct((N, t, OP), jnp.float32),
        grid_spec=pltpu.PrefetchScalarGridSpec(
            num_scalar_prefetch=0,
            grid=grid,
            in_specs=[
                # x block: one batch element (squeezed), all channels, TT time steps, full spatial.
                pl.BlockSpec((None, c, TT, wh), lambda n, ti: (n, 0, ti, 0)),
                # fused weight / bias: resident (constant block index -> no re-DMA per step).
                pl.BlockSpec((c, wh, OP), lambda n, ti: (0, 0, 0)),
                pl.BlockSpec((1, OP), lambda n, ti: (0, 0)),
            ],
            out_specs=pl.BlockSpec((None, TT, OP), lambda n, ti: (n, ti, 0)),
        ),
        compiler_params=pltpu.CompilerParams(
            dimension_semantics=("parallel", "parallel")),
        cost_estimate=cost,
    )(x4, wgt, b)

    return out[:, :, :outdims]


if __name__ == "__main__":
    # Small shapes consistent with the module: in_shape = (c, t, w, h)
    N, c, t, w, h = 2, 4, 8, 16, 16
    outdims = 8

    key = jax.random.PRNGKey(0)
    k_x, k_sp, k_ft = jax.random.split(key, 3)

    # Deterministic parameter init mirroring module.initialize(init_noise=0.001):
    x = jax.random.normal(k_x, (N, c, t, w, h), dtype=jnp.float32)
    spatial = 0.001 * jax.random.normal(k_sp, (outdims, 1, 1, w, h), dtype=jnp.float32)
    features = 0.001 * jax.random.normal(k_ft, (outdims, c, 1, 1, 1), dtype=jnp.float32)
    bias = jnp.zeros((outdims,), dtype=jnp.float32)  # bias.data.fill_(0)

    out = spatial_x_feature_linear3d(x, spatial, features, bias)
    out = jax.block_until_ready(out)
    assert out.shape == (N, t, outdims)

    # Pure-JAX reference (same math as the PyTorch forward).
    sp_r = jnp.maximum(spatial.reshape(outdims, w * h), 0.0)
    ft_r = jnp.maximum(features.reshape(outdims, c), 0.0)
    weight = (ft_r[:, :, None] * sp_r[:, None, :]).reshape(outdims, c * w * h)
    x_ref = jnp.transpose(x, (0, 2, 1, 3, 4)).reshape(N * t, c * w * h)
    ref = (x_ref @ weight.T + bias[None, :]).reshape(N, t, outdims)

    assert jnp.allclose(out, ref, atol=1e-5, rtol=1e-5), "mismatch vs reference"
    print("KERNEL_OK")
</pallas_src>

<mosaic_0001>
module attributes {stable_mosaic.version = 11 : i64} {
  func.func @_sxf_linear3d_kernel(%arg0: i32, %arg1: i32, %arg2: memref<1x4x8x256xf32, #tpu.memory_space<vmem>>, %arg3: memref<4x256x128xf32, #tpu.memory_space<vmem>>, %arg4: memref<1x128xf32, #tpu.memory_space<vmem>>, %arg5: memref<1x8x128xf32, #tpu.memory_space<vmem>>) attributes {dimension_semantics = [#tpu.dimension_semantics<parallel>, #tpu.dimension_semantics<parallel>], iteration_bounds = array<i64: 2, 1>, scalar_prefetch = 0 : i64, scratch_operands = 0 : i64, tpu.core_type = #tpu.core_type<tc>, window_params = [{transform_indices = @transform_0, window_bounds = array<i64: 1, 4, 8, 256>}, {pipeline_mode = #tpu.pipeline_mode<synchronous>, transform_indices = @transform_1, window_bounds = array<i64: 4, 256, 128>}, {pipeline_mode = #tpu.pipeline_mode<synchronous>, transform_indices = @transform_2, window_bounds = array<i64: 1, 128>}, {transform_indices = @transform_3, window_bounds = array<i64: 1, 8, 128>}]} {
    %c0 = arith.constant 0 : index
    %c0_0 = arith.constant 0 : index
    %c0_1 = arith.constant 0 : index
    %c0_2 = arith.constant 0 : index
    %0 = vector.load %arg2[%c0, %c0_0, %c0_1, %c0_2] : memref<1x4x8x256xf32, #tpu.memory_space<vmem>>, vector<1x1x8x256xf32>
    %1 = vector.shape_cast %0 : vector<1x1x8x256xf32> to vector<8x256xf32>
    %c0_3 = arith.constant 0 : index
    %c0_4 = arith.constant 0 : index
    %c0_5 = arith.constant 0 : index
    %2 = vector.load %arg3[%c0_3, %c0_4, %c0_5] : memref<4x256x128xf32, #tpu.memory_space<vmem>>, vector<1x256x128xf32>
    %3 = vector.shape_cast %2 : vector<1x256x128xf32> to vector<256x128xf32>
    %cst = arith.constant dense<0.000000e+00> : vector<8x128xf32>
    %4 = tpu.matmul %1, %3, %cst {dimension_numbers = #tpu.dot_dimension_numbers<[1], [0], [0], [1], [0, 0, 1, 1], [], []>} : vector<8x256xf32>, vector<256x128xf32>, vector<8x128xf32> -> vector<8x128xf32>
    %c0_6 = arith.constant 0 : index
    %c1 = arith.constant 1 : index
    %c0_7 = arith.constant 0 : index
    %c0_8 = arith.constant 0 : index
    %5 = vector.load %arg2[%c0_6, %c1, %c0_7, %c0_8] : memref<1x4x8x256xf32, #tpu.memory_space<vmem>>, vector<1x1x8x256xf32>
    %6 = vector.shape_cast %5 : vector<1x1x8x256xf32> to vector<8x256xf32>
    %c1_9 = arith.constant 1 : index
    %c0_10 = arith.constant 0 : index
    %c0_11 = arith.constant 0 : index
    %7 = vector.load %arg3[%c1_9, %c0_10, %c0_11] : memref<4x256x128xf32, #tpu.memory_space<vmem>>, vector<1x256x128xf32>
    %8 = vector.shape_cast %7 : vector<1x256x128xf32> to vector<256x128xf32>
    %cst_12 = arith.constant dense<0.000000e+00> : vector<8x128xf32>
    %9 = tpu.matmul %6, %8, %cst_12 {dimension_numbers = #tpu.dot_dimension_numbers<[1], [0], [0], [1], [0, 0, 1, 1], [], []>} : vector<8x256xf32>, vector<256x128xf32>, vector<8x128xf32> -> vector<8x128xf32>
    %10 = arith.addf %4, %9 : vector<8x128xf32>
    %c0_13 = arith.constant 0 : index
    %c2 = arith.constant 2 : index
    %c0_14 = arith.constant 0 : index
    %c0_15 = arith.constant 0 : index
    %11 = vector.load %arg2[%c0_13, %c2, %c0_14, %c0_15] : memref<1x4x8x256xf32, #tpu.memory_space<vmem>>, vector<1x1x8x256xf32>
    %12 = vector.shape_cast %11 : vector<1x1x8x256xf32> to vector<8x256xf32>
    %c2_16 = arith.constant 2 : index
    %c0_17 = arith.constant 0 : index
    %c0_18 = arith.constant 0 : index
    %13 = vector.load %arg3[%c2_16, %c0_17, %c0_18] : memref<4x256x128xf32, #tpu.memory_space<vmem>>, vector<1x256x128xf32>
    %14 = vector.shape_cast %13 : vector<1x256x128xf32> to vector<256x128xf32>
    %cst_19 = arith.constant dense<0.000000e+00> : vector<8x128xf32>
    %15 = tpu.matmul %12, %14, %cst_19 {dimension_numbers = #tpu.dot_dimension_numbers<[1], [0], [0], [1], [0, 0, 1, 1], [], []>} : vector<8x256xf32>, vector<256x128xf32>, vector<8x128xf32> -> vector<8x128xf32>
    %16 = arith.addf %10, %15 : vector<8x128xf32>
    %c0_20 = arith.constant 0 : index
    %c3 = arith.constant 3 : index
    %c0_21 = arith.constant 0 : index
    %c0_22 = arith.constant 0 : index
    %17 = vector.load %arg2[%c0_20, %c3, %c0_21, %c0_22] : memref<1x4x8x256xf32, #tpu.memory_space<vmem>>, vector<1x1x8x256xf32>
    %18 = vector.shape_cast %17 : vector<1x1x8x256xf32> to vector<8x256xf32>
    %c3_23 = arith.constant 3 : index
    %c0_24 = arith.constant 0 : index
    %c0_25 = arith.constant 0 : index
    %19 = vector.load %arg3[%c3_23, %c0_24, %c0_25] : memref<4x256x128xf32, #tpu.memory_space<vmem>>, vector<1x256x128xf32>
    %20 = vector.shape_cast %19 : vector<1x256x128xf32> to vector<256x128xf32>
    %cst_26 = arith.constant dense<0.000000e+00> : vector<8x128xf32>
    %21 = tpu.matmul %18, %20, %cst_26 {dimension_numbers = #tpu.dot_dimension_numbers<[1], [0], [0], [1], [0, 0, 1, 1], [], []>} : vector<8x256xf32>, vector<256x128xf32>, vector<8x128xf32> -> vector<8x128xf32>
    %22 = arith.addf %16, %21 : vector<8x128xf32>
    %c0_27 = arith.constant 0 : index
    %c0_28 = arith.constant 0 : index
    %23 = vector.load %arg4[%c0_27, %c0_28] : memref<1x128xf32, #tpu.memory_space<vmem>>, vector<1x128xf32>
    %24 = vector.broadcast %23 : vector<1x128xf32> to vector<8x128xf32>
    %25 = arith.addf %22, %24 : vector<8x128xf32>
    %c0_29 = arith.constant 0 : index
    %c0_30 = arith.constant 0 : index
    %c0_31 = arith.constant 0 : index
    %26 = vector.load %arg5[%c0_29, %c0_30, %c0_31] : memref<1x8x128xf32, #tpu.memory_space<vmem>>, vector<1x8x128xf32>
    %27 = vector.shape_cast %26 : vector<1x8x128xf32> to vector<8x128xf32>
    %28 = vector.shape_cast %25 : vector<8x128xf32> to vector<1x8x128xf32>
    tpu.vector_store %arg5[%c0_29, %c0_30, %c0_31], %28 {strides = array<i32>} : memref<1x8x128xf32, #tpu.memory_space<vmem>>, vector<1x8x128xf32>,
    return
  }
  func.func @transform_0(%arg0: i32, %arg1: i32) -> (i32, i32, i32, i32) {
    %c0_i32 = arith.constant 0 : i32
    %c0_i32_0 = arith.constant 0 : i32
    %c0_i32_1 = arith.constant 0 : i32
    return %arg0, %c0_i32, %arg1, %c0_i32_0 : i32, i32, i32, i32
  }
  func.func @transform_1(%arg0: i32, %arg1: i32) -> (i32, i32, i32) {
    %c0_i32 = arith.constant 0 : i32
    %c0_i32_0 = arith.constant 0 : i32
    %c0_i32_1 = arith.constant 0 : i32
    %c0_i32_2 = arith.constant 0 : i32
    return %c0_i32, %c0_i32_0, %c0_i32_1 : i32, i32, i32
  }
  func.func @transform_2(%arg0: i32, %arg1: i32) -> (i32, i32) {
    %c0_i32 = arith.constant 0 : i32
    %c0_i32_0 = arith.constant 0 : i32
    %c0_i32_1 = arith.constant 0 : i32
    return %c0_i32, %c0_i32_0 : i32, i32
  }
  func.func @transform_3(%arg0: i32, %arg1: i32) -> (i32, i32, i32) {
    %c0_i32 = arith.constant 0 : i32
    %c0_i32_0 = arith.constant 0 : i32
    return %arg0, %arg1, %c0_i32 : i32, i32, i32
  }
}

</mosaic_0001>

<llo_original>
// kernel: tpu_custom_call.1
$region0: #{tpu_custom_call.1}
  #allocation0 [shape = 'u32[]', space=smem, size = 0x4, offset = 0x4, fixed_abs, tag = 'smem constant byte address 0x4 - core index']
  #allocation1 [shape = 'u32[144,128]{1,0:T(1,128)}', space=vmem, size = 0x12000, scoped, tag = 'internal scratch']
  %s0 = inlined_call_operand.hbm [shape: f32[2,4,8,256], index: 0, kind: input, shape index: {}]
  %s1 = inlined_call_operand.hbm [shape: f32[4,256,128], index: 1, kind: input, shape index: {}]
  %s2 = inlined_call_operand.vmem [shape: f32[1,128], index: 2, kind: input, shape index: {}]
  %s3 = inlined_call_operand.hbm [shape: f32[2,8,128], index: 3, kind: output, shape index: {}]
  %s4 = sld [smem:[#allocation0]]
  $region53: #{tpu_custom_call.1} parent=0
    _
  %s6 = ssub.s32 1, %s4
  %s7 = scalar_select 0, %s6, %s4
  $region1: #{tpu_custom_call.1} parent=0
    #allocation2 [shape = 'u8[65536]{0}', space=vmem, size = 0x10000, scoped, tag = 'input window, operand 0']
    #allocation3 [shape = 's32[2]{0}', space=sflag, size = 0x8, scoped, tag = 'scoped memory for tpu_custom_call.1']
    #allocation4 [shape = 's32[2]{0}', space=sflag, size = 0x8, scoped, tag = 'scoped memory for tpu_custom_call.1']
    #allocation5 [shape = 'u8[524288]{0}', space=vmem, size = 0x80000, scoped, tag = 'input window, operand 1, single buffered']
    #allocation6 [shape = 's32[1]{0}', space=sflag, size = 0x4, scoped, tag = 'scoped memory for tpu_custom_call.1']
    #allocation7 [shape = 'u8[8192]{0}', space=vmem, size = 0x2000, scoped, tag = 'output window, operand 0']
    %8 = vsyncpa [#allocation3], 0
    %s9 = scalar_lea.sflag [#allocation3], 1
    %10 = vsyncpa %s9, 0
    %11 = vsyncpa [#allocation6], 0
    %12 = vsyncpa [#allocation4], 0
    %s13 = scalar_lea.sflag [#allocation4], 1
    %14 = vsyncpa %s13, 0
    loop: start=0, step=1, limit=4
    $region2: #{tpu_custom_call.1} parent=1 // loop_pre_header
      _
    $region3: #{tpu_custom_call.1} parent=1 // loop_header
      %s16 = sphi 0, %s20
      %p17 = scmp.ge.s32.totalorder %s16, 4
      %s23 = sphi 0, %s35
      %s24 = sphi 0, %s31
      %s25 = sphi 0, %s23
      %s26 = sphi 0, %s24
      %s27 = sphi 0, %s25
      %s28 = sphi 0, %s26
      %s40 = sphi 0, %s42
      %s43 = sphi 0, %s40
      %s44 = sphi 0, %s43
      %s60 = sphi 0, %s44
      %s64 = sphi 0, %s64
      %s66 = sphi 0, %s64
      %s67 = sphi 0, %s66
      %s81 = sphi 0, %s67
      %s85 = sphi 0, %s85
      %s87 = sphi 0, %s85
      %s88 = sphi 0, %s87
      %s102 = sphi 0, %s88
      %s110 = sphi 0, %s112
      %s113 = sphi 0, %s110
      %s114 = sphi 0, %s113
      %s130 = sphi 0, %s114
    $region4: #{tpu_custom_call.1} parent=1 // loop_header_branch
      %19 = sbr.rel (%p17) target = $region8
    $region5: #{tpu_custom_call.1} parent=1 // loop_body
      %s21 = ssub.s32 %s16, 1
      %s22 = ssub.s32 %s16, 2
      %s29 = sadd.s32 1, %s24
      %p30 = scmp.ge.s32.totalorder %s29, 1
      %s31 = scalar_select %p30, 0, %s29
      %s32 = sadd.s32 1, %s23
      %s33 = scalar_select %p30, %s32, %s23
      %p34 = scmp.ge.s32.totalorder %s33, 2
      %s35 = scalar_select %p34, 0, %s33
      %s36 = ssub.s32 %s23, %s35
      %s37 = ssub.s32 %s24, %s31
      %s38 = sor.u32 %s36, %s37
      %p39 = scmp.eq.s32.totalorder %s38, 0
      %s41 = sadd.s32 %s40, 1
      %s42 = scalar_select %p39, %s40, %s41
      %p45 = pneg %p39
      %p46 = scmp.eq.s32.totalorder %s16, 1
      %p47 = por %p45, %p46
      %p48 = scmp.ne.s32.totalorder %s40, %s43
      %p49 = scmp.eq.s32.totalorder %s16, 0
      %p50 = por %p48, %p49
      %p51 = scmp.ne.s32.totalorder %s40, %s43
      %p52 = scmp.eq.s32.totalorder %s21, 1
      %p53 = por %p51, %p52
      %p54 = scmp.ne.s32.totalorder %s43, %s44
      %p55 = scmp.eq.s32.totalorder %s21, 0
      %p56 = por %p54, %p55
      %p57 = scmp.ne.s32.totalorder %s43, %s44
      %p58 = scmp.eq.s32.totalorder %s22, 1
      %p59 = por %p57, %p58
      %p61 = scmp.ne.s32.totalorder %s44, %s60
      %p62 = scmp.eq.s32.totalorder %s22, 0
      %p63 = por %p61, %p62
      %s65 = sadd.s32 %s64, 1
      %p68 = scmp.eq.s32.totalorder %s16, 1
      %p69 = scmp.ne.s32.totalorder %s64, %s66
      %p70 = scmp.eq.s32.totalorder %s16, 0
      %p71 = por %p69, %p70
      %p72 = scmp.ne.s32.totalorder %s64, %s66
      %p73 = scmp.eq.s32.totalorder %s21, 1
      %p74 = por %p72, %p73
      %p75 = scmp.ne.s32.totalorder %s66, %s67
      %p76 = scmp.eq.s32.totalorder %s21, 0
      %p77 = por %p75, %p76
      %p78 = scmp.ne.s32.totalorder %s66, %s67
      %p79 = scmp.eq.s32.totalorder %s22, 1
      %p80 = por %p78, %p79
      %p82 = scmp.ne.s32.totalorder %s67, %s81
      %p83 = scmp.eq.s32.totalorder %s22, 0
      %p84 = por %p82, %p83
      %s86 = sadd.s32 %s85, 1
      %p89 = scmp.eq.s32.totalorder %s16, 1
      %p90 = scmp.ne.s32.totalorder %s85, %s87
      %p91 = scmp.eq.s32.totalorder %s16, 0
      %p92 = por %p90, %p91
      %p93 = scmp.ne.s32.totalorder %s85, %s87
      %p94 = scmp.eq.s32.totalorder %s21, 1
      %p95 = por %p93, %p94
      %p96 = scmp.ne.s32.totalorder %s87, %s88
      %p97 = scmp.eq.s32.totalorder %s21, 0
      %p98 = por %p96, %p97
      %p99 = scmp.ne.s32.totalorder %s87, %s88
      %p100 = scmp.eq.s32.totalorder %s22, 1
      %p101 = por %p99, %p100
      %p103 = scmp.ne.s32.totalorder %s88, %s102
      %p104 = scmp.eq.s32.totalorder %s22, 0
      %p105 = por %p103, %p104
      %s106 = ssub.s32 %s23, %s35
      %s107 = ssub.s32 %s24, %s31
      %s108 = sor.u32 %s106, %s107
      %p109 = scmp.eq.s32.totalorder %s108, 0
      %s111 = sadd.s32 %s110, 1
      %s112 = scalar_select %p109, %s110, %s111
      %p115 = pneg %p109
      %p116 = scmp.eq.s32.totalorder %s16, 1
      %p117 = por %p115, %p116
      %p118 = scmp.ne.s32.totalorder %s110, %s113
      %p119 = scmp.eq.s32.totalorder %s16, 0
      %p120 = por %p118, %p119
      %p121 = scmp.ne.s32.totalorder %s110, %s113
      %p122 = scmp.eq.s32.totalorder %s21, 1
      %p123 = por %p121, %p122
      %p124 = scmp.ne.s32.totalorder %s113, %s114
      %p125 = scmp.eq.s32.totalorder %s21, 0
      %p126 = por %p124, %p125
      %p127 = scmp.ne.s32.totalorder %s113, %s114
      %p128 = scmp.eq.s32.totalorder %s22, 1
      %p129 = por %p127, %p128
      %p131 = scmp.ne.s32.totalorder %s114, %s130
      %p132 = scmp.eq.s32.totalorder %s22, 0
      %p133 = por %p131, %p132
      %p134 = scmp.le.s32.totalorder 1, %s16
      %p135 = scmp.lt.s32.totalorder %s16, 3
      %p136 = pnand %p134, %p135
      %p137 = pneg %p136
      // Predicated region
      $region9: #{tpu_custom_call.1} parent=5 // pred_check
        _
      $region10: #{tpu_custom_call.1} parent=5 // pred_check_branch
        %139 = sbr.rel (%p136) target = $region12
      $region11: #{tpu_custom_call.1} parent=5 // pred_region
        %s140 = ssub.s32 %s16, 1
        // Predicated region
        $region13: #{tpu_custom_call.1} parent=11 // pred_check
          %p141 = pneg %p77
        $region14: #{tpu_custom_call.1} parent=11 // pred_check_branch
          %143 = sbr.rel (%p141) target = $region16
        $region15: #{tpu_custom_call.1} parent=11 // pred_region
          %s145 = ssub.s32 16384, 16384
          %146 = vsyncadd [#allocation6], %s145
          %s147 = sshll.u32 [#allocation5], 4
          %s148 = int_to_ptr.vmem [resolvable:$true] %s147
          %153 = dma.hbm_to_vmem [thread:$0]  %s1, 16384, %s148, [#allocation6], 128, 128, 8
        $region16: #{tpu_custom_call.1} parent=11 // pred_fallthru
          _
        // Predicated region
        $region17: #{tpu_custom_call.1} parent=11 // pred_check
          %p154 = pneg %p98
        $region18: #{tpu_custom_call.1} parent=11 // pred_check_branch
          %156 = sbr.rel (%p154) target = $region20
        $region19: #{tpu_custom_call.1} parent=11 // pred_region
          _
        $region20: #{tpu_custom_call.1} parent=11 // pred_fallthru
          _
      $region12: #{tpu_custom_call.1} parent=5 // pred_fallthru
        _
      %p157 = scmp.lt.s32.totalorder %s16, 2
      // Predicated region
      $region21: #{tpu_custom_call.1} parent=5 // pred_check
        %p158 = pneg %p157
      $region22: #{tpu_custom_call.1} parent=5 // pred_check_branch
        %160 = sbr.rel (%p158) target = $region24
      $region23: #{tpu_custom_call.1} parent=5 // pred_region
        // Predicated region
        $region25: #{tpu_custom_call.1} parent=23 // pred_check
          %p161 = pneg %p50
        $region26: #{tpu_custom_call.1} parent=23 // pred_check_branch
          %163 = sbr.rel (%p161) target = $region28
        $region27: #{tpu_custom_call.1} parent=23 // pred_region
          %s164 = sand.u32 %s40, 1
          %s165 = scalar_lea.sflag [#allocation3], %s164
          %s166 = sand.u32 %s40, 1
          %s167 = smul.addr %s166, 64
          %s168 = scalar_lea.vmem [#allocation2], %s167
          %s170 = ssub.s32 1024, 1024
          %171 = vsyncadd %s165, %s170
          %s172 = smul.addr %s24, 2
          %s173 = smul.addr %s23, 8
          %s174 = sadd.s32 %s172, %s173
          %s175 = smul.addr %s174, 128
          %s176 = scalar_lea.hbm %s0, %s175
          %s177 = sshll.u32 %s168, 4
          %s178 = int_to_ptr.vmem [resolvable:$true] %s177
          %183 = dma.hbm_to_vmem [thread:$0]  %s176, 1024, %s178, %s165, 256, 256, 16
        $region28: #{tpu_custom_call.1} parent=23 // pred_fallthru
          _
      $region24: #{tpu_custom_call.1} parent=5 // pred_fallthru
        _
      %p184 = scmp.le.s32.totalorder 1, %s16
      %p185 = scmp.lt.s32.totalorder %s16, 3
      %p186 = pnand %p184, %p185
      %p187 = pneg %p186
      // Predicated region
      $region29: #{tpu_custom_call.1} parent=5 // pred_check
        _
      $region30: #{tpu_custom_call.1} parent=5 // pred_check_branch
        %189 = sbr.rel (%p186) target = $region32
      $region31: #{tpu_custom_call.1} parent=5 // pred_region
        %s190 = ssub.s32 %s16, 1
        %s191 = sand.u32 %s43, 1
        %s192 = scalar_lea.sflag [#allocation3], %s191
        %s193 = sand.u32 %s43, 1
        %s194 = smul.addr %s193, 64
        %s195 = scalar_lea.vmem [#allocation2], %s194
        // Predicated region
        $region33: #{tpu_custom_call.1} parent=31 // pred_check
          %p196 = pneg %p56
        $region34: #{tpu_custom_call.1} parent=31 // pred_check_branch
          %198 = sbr.rel (%p196) target = $region36
        $region35: #{tpu_custom_call.1} parent=31 // pred_region
          %199 = dma.done %s192, 1024
        $region36: #{tpu_custom_call.1} parent=31 // pred_fallthru
          _
        // Predicated region
        $region37: #{tpu_custom_call.1} parent=31 // pred_check
          %p200 = pneg %p77
        $region38: #{tpu_custom_call.1} parent=31 // pred_check_branch
          %202 = sbr.rel (%p200) target = $region40
        $region39: #{tpu_custom_call.1} parent=31 // pred_region
          %203 = dma.done [#allocation6], 16384
        $region40: #{tpu_custom_call.1} parent=31 // pred_fallthru
          _
        %s204 = sand.u32 %s43, 1
        %s205 = scalar_lea.sflag [#allocation3], %s204
        %s206 = sand.u32 %s43, 1
        %s207 = smul.addr %s206, 64
        %s208 = scalar_lea.vmem [#allocation2], %s207
        %p209 = pneg %p56
        %p210 = pneg %p53
        %p211 = pneg %p77
        %p212 = pneg %p74
        %p213 = pneg %p98
        %p214 = pneg %p95
        %p215 = pneg %p126
        %p216 = pneg %p123
        %s217 = sand.u32 %s113, 1
        %s218 = scalar_lea.sflag [#allocation4], %s217
        %s219 = sand.u32 %s113, 1
        %s220 = smul.addr %s219, 8
        %s221 = scalar_lea.vmem [#allocation7], %s220
        %v222 = vld [vmem:[%s195] sm:$0xff]
        %v223 = vld [vmem:[%s195 + $0x8] sm:$0xff]
        %v224 = vld [vmem:[#allocation5] sm:$0xff]
        %v225 = vld [vmem:[#allocation5 + $0x8] sm:$0xff]
        %v226 = vld [vmem:[#allocation5 + $0x10] sm:$0xff]
        %v227 = vld [vmem:[#allocation5 + $0x18] sm:$0xff]
        %v228 = vld [vmem:[#allocation5 + $0x20] sm:$0xff]
        %v229 = vld [vmem:[#allocation5 + $0x28] sm:$0xff]
        %v230 = vld [vmem:[#allocation5 + $0x30] sm:$0xff]
        %v231 = vld [vmem:[#allocation5 + $0x38] sm:$0xff]
        %v232 = vld [vmem:[#allocation5 + $0x40] sm:$0xff]
        %v233 = vld [vmem:[#allocation5 + $0x48] sm:$0xff]
        %v234 = vld [vmem:[#allocation5 + $0x50] sm:$0xff]
        %v235 = vld [vmem:[#allocation5 + $0x58] sm:$0xff]
        %v236 = vld [vmem:[#allocation5 + $0x60] sm:$0xff]
        %v237 = vld [vmem:[#allocation5 + $0x68] sm:$0xff]
        %v238 = vld [vmem:[#allocation5 + $0x70] sm:$0xff]
        %v239 = vld [vmem:[#allocation5 + $0x78] sm:$0xff]
        %v240 = vld [vmem:[#allocation5 + $0x80] sm:$0xff]
        %v241 = vld [vmem:[#allocation5 + $0x88] sm:$0xff]
        %v242 = vld [vmem:[#allocation5 + $0x90] sm:$0xff]
        %v243 = vld [vmem:[#allocation5 + $0x98] sm:$0xff]
        %v244 = vld [vmem:[#allocation5 + $0xa0] sm:$0xff]
        %v245 = vld [vmem:[#allocation5 + $0xa8] sm:$0xff]
        %v246 = vld [vmem:[#allocation5 + $0xb0] sm:$0xff]
        %v247 = vld [vmem:[#allocation5 + $0xb8] sm:$0xff]
        %v248 = vld [vmem:[#allocation5 + $0xc0] sm:$0xff]
        %v249 = vld [vmem:[#allocation5 + $0xc8] sm:$0xff]
        %v250 = vld [vmem:[#allocation5 + $0xd0] sm:$0xff]
        %v251 = vld [vmem:[#allocation5 + $0xd8] sm:$0xff]
        %v252 = vld [vmem:[#allocation5 + $0xe0] sm:$0xff]
        %v253 = vld [vmem:[#allocation5 + $0xe8] sm:$0xff]
        %v254 = vld [vmem:[#allocation5 + $0xf0] sm:$0xff]
        %v255 = vld [vmem:[#allocation5 + $0xf8] sm:$0xff]
        %s256 = scalar_lea.vmem %s195, 16 [#allocation2]
        %v257 = vld [vmem:[%s256] sm:$0xff]
        %v258 = vld [vmem:[%s256 + $0x8] sm:$0xff]
        %s259 = scalar_lea.vmem [#allocation5], 256
        %v260 = vld [vmem:[%s259] sm:$0xff]
        %v261 = vld [vmem:[%s259 + $0x8] sm:$0xff]
        %v262 = vld [vmem:[%s259 + $0x10] sm:$0xff]
        %v263 = vld [vmem:[%s259 + $0x18] sm:$0xff]
        %v264 = vld [vmem:[%s259 + $0x20] sm:$0xff]
        %v265 = vld [vmem:[%s259 + $0x28] sm:$0xff]
        %v266 = vld [vmem:[%s259 + $0x30] sm:$0xff]
        %v267 = vld [vmem:[%s259 + $0x38] sm:$0xff]
        %v268 = vld [vmem:[%s259 + $0x40] sm:$0xff]
        %v269 = vld [vmem:[%s259 + $0x48] sm:$0xff]
        %v270 = vld [vmem:[%s259 + $0x50] sm:$0xff]
        %v271 = vld [vmem:[%s259 + $0x58] sm:$0xff]
        %v272 = vld [vmem:[%s259 + $0x60] sm:$0xff]
        %v273 = vld [vmem:[%s259 + $0x68] sm:$0xff]
        %v274 = vld [vmem:[%s259 + $0x70] sm:$0xff]
        %v275 = vld [vmem:[%s259 + $0x78] sm:$0xff]
        %v276 = vld [vmem:[%s259 + $0x80] sm:$0xff]
        %v277 = vld [vmem:[%s259 + $0x88] sm:$0xff]
        %v278 = vld [vmem:[%s259 + $0x90] sm:$0xff]
        %v279 = vld [vmem:[%s259 + $0x98] sm:$0xff]
        %v280 = vld [vmem:[%s259 + $0xa0] sm:$0xff]
        %v281 = vld [vmem:[%s259 + $0xa8] sm:$0xff]
        %v282 = vld [vmem:[%s259 + $0xb0] sm:$0xff]
        %v283 = vld [vmem:[%s259 + $0xb8] sm:$0xff]
        %v284 = vld [vmem:[%s259 + $0xc0] sm:$0xff]
        %v285 = vld [vmem:[%s259 + $0xc8] sm:$0xff]
        %v286 = vld [vmem:[%s259 + $0xd0] sm:$0xff]
        %v287 = vld [vmem:[%s259 + $0xd8] sm:$0xff]
        %v288 = vld [vmem:[%s259 + $0xe0] sm:$0xff]
        %v289 = vld [vmem:[%s259 + $0xe8] sm:$0xff]
        %v290 = vld [vmem:[%s259 + $0xf0] sm:$0xff]
        %v291 = vld [vmem:[%s259 + $0xf8] sm:$0xff]
        %292 = vmatprep.subr.mxu0 0.0
        %293 = vmatpush1.msra.mxu0 %v275
        %294 = vmatprep.subr.mxu0 0.0
        %295 = vmatpush1.msra.mxu0 %v274
        %296 = vmatprep.subr.mxu0 0.0
        %297 = vmatpush1.msra.mxu0 %v273
        %298 = vmatprep.subr.mxu0 0.0
        %299 = vmatpush1.msra.mxu0 %v272
        %300 = vmatprep.subr.mxu0 0.0
        %301 = vmatpush1.msra.mxu0 %v271
        %302 = vmatprep.subr.mxu0 0.0
        %303 = vmatpush1.msra.mxu0 %v270
        %304 = vmatprep.subr.mxu0 0.0
        %305 = vmatpush1.msra.mxu0 %v269
        %306 = vmatprep.subr.mxu0 0.0
        %307 = vmatpush1.msra.mxu0 %v268
        %308 = vmatprep.subr.mxu0 0.0
        %309 = vmatpush1.msra.mxu0 %v267
        %310 = vmatprep.subr.mxu0 0.0
        %311 = vmatpush1.msra.mxu0 %v266
        %312 = vmatprep.subr.mxu0 0.0
        %313 = vmatpush1.msra.mxu0 %v265
        %314 = vmatprep.subr.mxu0 0.0
        %315 = vmatpush1.msra.mxu0 %v264
        %316 = vmatprep.subr.mxu0 0.0
        %317 = vmatpush1.msra.mxu0 %v263
        %318 = vmatprep.subr.mxu0 0.0
        %319 = vmatpush1.msra.mxu0 %v262
        %320 = vmatprep.subr.mxu0 0.0
        %321 = vmatpush1.msra.mxu0 %v261
        %322 = vmatprep.subr.mxu0 0.0
        %323 = vmatpush1.msra.mxu0 %v260
        %324 = vmatprep.subr.mxu0 0.0
        %325 = vmatpush2.msra.mxu0 %v291
        %326 = vmatprep.subr.mxu0 0.0
        %327 = vmatpush2.msra.mxu0 %v290
        %328 = vmatprep.subr.mxu0 0.0
        %329 = vmatpush2.msra.mxu0 %v289
        %330 = vmatprep.subr.mxu0 0.0
        %331 = vmatpush2.msra.mxu0 %v288
        %332 = vmatprep.subr.mxu0 0.0
        %333 = vmatpush2.msra.mxu0 %v287
        %334 = vmatprep.subr.mxu0 0.0
        %335 = vmatpush2.msra.mxu0 %v286
        %336 = vmatprep.subr.mxu0 0.0
        %337 = vmatpush2.msra.mxu0 %v285
        %338 = vmatprep.subr.mxu0 0.0
        %339 = vmatpush2.msra.mxu0 %v284
        %340 = vmatprep.subr.mxu0 0.0
        %341 = vmatpush2.msra.mxu0 %v283
        %342 = vmatprep.subr.mxu0 0.0
        %343 = vmatpush2.msra.mxu0 %v282
        %344 = vmatprep.subr.mxu0 0.0
        %345 = vmatpush2.msra.mxu0 %v281
        %346 = vmatprep.subr.mxu0 0.0
        %347 = vmatpush2.msra.mxu0 %v280
        %348 = vmatprep.subr.mxu0 0.0
        %349 = vmatpush2.msra.mxu0 %v279
        %350 = vmatprep.subr.mxu0 0.0
        %351 = vmatpush2.msra.mxu0 %v278
        %352 = vmatprep.subr.mxu0 0.0
        %353 = vmatpush2.msra.mxu0 %v277
        %354 = vmatprep.subr.mxu0 0.0
        %355 = vmatpush2.msra.mxu0 %v276
        %356 = vmatprep.mubr.f32.mxu0 %v258
        %357 = vmatmul.mubr.f32.gmra.mxu0 %v257
        %v358 = vpop.f32.mrf.mxu0
        %v359 = vadd.f32 0.0, %v358
        %v360 = vpop.f32.mrf.mxu0
        %361 = vdwg.mxu0
        %362 = vmatprep.subr.mxu0 0.0
        %363 = vmatpush1.msra.mxu0 %v239
        %364 = vmatprep.subr.mxu0 0.0
        %365 = vmatpush1.msra.mxu0 %v238
        %366 = vmatprep.subr.mxu0 0.0
        %367 = vmatpush1.msra.mxu0 %v237
        %368 = vmatprep.subr.mxu0 0.0
        %369 = vmatpush1.msra.mxu0 %v236
        %370 = vmatprep.subr.mxu0 0.0
        %371 = vmatpush1.msra.mxu0 %v235
        %372 = vmatprep.subr.mxu0 0.0
        %373 = vmatpush1.msra.mxu0 %v234
        %374 = vmatprep.subr.mxu0 0.0
        %375 = vmatpush1.msra.mxu0 %v233
        %376 = vmatprep.subr.mxu0 0.0
        %377 = vmatpush1.msra.mxu0 %v232
        %378 = vmatprep.subr.mxu0 0.0
        %379 = vmatpush1.msra.mxu0 %v231
        %380 = vmatprep.subr.mxu0 0.0
        %381 = vmatpush1.msra.mxu0 %v230
        %382 = vmatprep.subr.mxu0 0.0
        %383 = vmatpush1.msra.mxu0 %v229
        %384 = vmatprep.subr.mxu0 0.0
        %385 = vmatpush1.msra.mxu0 %v228
        %386 = vmatprep.subr.mxu0 0.0
        %387 = vmatpush1.msra.mxu0 %v227
        %388 = vmatprep.subr.mxu0 0.0
        %389 = vmatpush1.msra.mxu0 %v226
        %390 = vmatprep.subr.mxu0 0.0
        %391 = vmatpush1.msra.mxu0 %v225
        %392 = vmatprep.subr.mxu0 0.0
        %393 = vmatpush1.msra.mxu0 %v224
        %394 = vmatprep.subr.mxu0 0.0
        %395 = vmatpush2.msra.mxu0 %v255
        %396 = vmatprep.subr.mxu0 0.0
        %397 = vmatpush2.msra.mxu0 %v254
        %398 = vmatprep.subr.mxu0 0.0
        %399 = vmatpush2.msra.mxu0 %v253
        %400 = vmatprep.subr.mxu0 0.0
        %401 = vmatpush2.msra.mxu0 %v252
        %402 = vmatprep.subr.mxu0 0.0
        %403 = vmatpush2.msra.mxu0 %v251
        %404 = vmatprep.subr.mxu0 0.0
        %405 = vmatpush2.msra.mxu0 %v250
        %406 = vmatprep.subr.mxu0 0.0
        %407 = vmatpush2.msra.mxu0 %v249
        %408 = vmatprep.subr.mxu0 0.0
        %409 = vmatpush2.msra.mxu0 %v248
        %410 = vmatprep.subr.mxu0 0.0
        %411 = vmatpush2.msra.mxu0 %v247
        %412 = vmatprep.subr.mxu0 0.0
        %413 = vmatpush2.msra.mxu0 %v246
        %414 = vmatprep.subr.mxu0 0.0
        %415 = vmatpush2.msra.mxu0 %v245
        %416 = vmatprep.subr.mxu0 0.0
        %417 = vmatpush2.msra.mxu0 %v244
        %418 = vmatprep.subr.mxu0 0.0
        %419 = vmatpush2.msra.mxu0 %v243
        %420 = vmatprep.subr.mxu0 0.0
        %421 = vmatpush2.msra.mxu0 %v242
        %422 = vmatprep.subr.mxu0 0.0
        %423 = vmatpush2.msra.mxu0 %v241
        %424 = vmatprep.subr.mxu0 0.0
        %425 = vmatpush2.msra.mxu0 %v240
        %426 = vmatprep.mubr.f32.mxu0 %v223
        %427 = vmatmul.mubr.f32.gmra.mxu0 %v222
        %v428 = vpop.f32.mrf.mxu0
        %v429 = vadd.f32 %v359, %v428
        %v430 = vpop.f32.mrf.mxu0
        %431 = vdwg.mxu0
        %s432 = scalar_lea.vmem %s195, 32 [#allocation2]
        %v433 = vld [vmem:[%s432] sm:$0xff]
        %v434 = vld [vmem:[%s432 + $0x8] sm:$0xff]
        %s435 = scalar_lea.vmem [#allocation5], 512
        %v436 = vld [vmem:[%s435] sm:$0xff]
        %v437 = vld [vmem:[%s435 + $0x8] sm:$0xff]
        %v438 = vld [vmem:[%s435 + $0x10] sm:$0xff]
        %v439 = vld [vmem:[%s435 + $0x18] sm:$0xff]
        %v440 = vld [vmem:[%s435 + $0x20] sm:$0xff]
        %v441 = vld [vmem:[%s435 + $0x28] sm:$0xff]
        %v442 = vld [vmem:[%s435 + $0x30] sm:$0xff]
        %v443 = vld [vmem:[%s435 + $0x38] sm:$0xff]
        %v444 = vld [vmem:[%s435 + $0x40] sm:$0xff]
        %v445 = vld [vmem:[%s435 + $0x48] sm:$0xff]
        %v446 = vld [vmem:[%s435 + $0x50] sm:$0xff]
        %v447 = vld [vmem:[%s435 + $0x58] sm:$0xff]
        %v448 = vld [vmem:[%s435 + $0x60] sm:$0xff]
        %v449 = vld [vmem:[%s435 + $0x68] sm:$0xff]
        %v450 = vld [vmem:[%s435 + $0x70] sm:$0xff]
        %v451 = vld [vmem:[%s435 + $0x78] sm:$0xff]
        %v452 = vld [vmem:[%s435 + $0x80] sm:$0xff]
        %v453 = vld [vmem:[%s435 + $0x88] sm:$0xff]
        %v454 = vld [vmem:[%s435 + $0x90] sm:$0xff]
        %v455 = vld [vmem:[%s435 + $0x98] sm:$0xff]
        %v456 = vld [vmem:[%s435 + $0xa0] sm:$0xff]
        %v457 = vld [vmem:[%s435 + $0xa8] sm:$0xff]
        %v458 = vld [vmem:[%s435 + $0xb0] sm:$0xff]
        %v459 = vld [vmem:[%s435 + $0xb8] sm:$0xff]
        %v460 = vld [vmem:[%s435 + $0xc0] sm:$0xff]
        %v461 = vld [vmem:[%s435 + $0xc8] sm:$0xff]
        %v462 = vld [vmem:[%s435 + $0xd0] sm:$0xff]
        %v463 = vld [vmem:[%s435 + $0xd8] sm:$0xff]
        %v464 = vld [vmem:[%s435 + $0xe0] sm:$0xff]
        %v465 = vld [vmem:[%s435 + $0xe8] sm:$0xff]
        %v466 = vld [vmem:[%s435 + $0xf0] sm:$0xff]
        %v467 = vld [vmem:[%s435 + $0xf8] sm:$0xff]
        %468 = vmatprep.subr.mxu0 0.0
        %469 = vmatpush1.msra.mxu0 %v451
        %470 = vmatprep.subr.mxu0 0.0
        %471 = vmatpush1.msra.mxu0 %v450
        %472 = vmatprep.subr.mxu0 0.0
        %473 = vmatpush1.msra.mxu0 %v449
        %474 = vmatprep.subr.mxu0 0.0
        %475 = vmatpush1.msra.mxu0 %v448
        %476 = vmatprep.subr.mxu0 0.0
        %477 = vmatpush1.msra.mxu0 %v447
        %478 = vmatprep.subr.mxu0 0.0
        %479 = vmatpush1.msra.mxu0 %v446
        %480 = vmatprep.subr.mxu0 0.0
        %481 = vmatpush1.msra.mxu0 %v445
        %482 = vmatprep.subr.mxu0 0.0
        %483 = vmatpush1.msra.mxu0 %v444
        %484 = vmatprep.subr.mxu0 0.0
        %485 = vmatpush1.msra.mxu0 %v443
        %486 = vmatprep.subr.mxu0 0.0
        %487 = vmatpush1.msra.mxu0 %v442
        %488 = vmatprep.subr.mxu0 0.0
        %489 = vmatpush1.msra.mxu0 %v441
        %490 = vmatprep.subr.mxu0 0.0
        %491 = vmatpush1.msra.mxu0 %v440
        %492 = vmatprep.subr.mxu0 0.0
        %493 = vmatpush1.msra.mxu0 %v439
        %494 = vmatprep.subr.mxu0 0.0
        %495 = vmatpush1.msra.mxu0 %v438
        %496 = vmatprep.subr.mxu0 0.0
        %497 = vmatpush1.msra.mxu0 %v437
        %498 = vmatprep.subr.mxu0 0.0
        %499 = vmatpush1.msra.mxu0 %v436
        %500 = vmatprep.subr.mxu0 0.0
        %501 = vmatpush2.msra.mxu0 %v467
        %502 = vmatprep.subr.mxu0 0.0
        %503 = vmatpush2.msra.mxu0 %v466
        %504 = vmatprep.subr.mxu0 0.0
        %505 = vmatpush2.msra.mxu0 %v465
        %506 = vmatprep.subr.mxu0 0.0
        %507 = vmatpush2.msra.mxu0 %v464
        %508 = vmatprep.subr.mxu0 0.0
        %509 = vmatpush2.msra.mxu0 %v463
        %510 = vmatprep.subr.mxu0 0.0
        %511 = vmatpush2.msra.mxu0 %v462
        %512 = vmatprep.subr.mxu0 0.0
        %513 = vmatpush2.msra.mxu0 %v461
        %514 = vmatprep.subr.mxu0 0.0
        %515 = vmatpush2.msra.mxu0 %v460
        %516 = vmatprep.subr.mxu0 0.0
        %517 = vmatpush2.msra.mxu0 %v459
        %518 = vmatprep.subr.mxu0 0.0
        %519 = vmatpush2.msra.mxu0 %v458
        %520 = vmatprep.subr.mxu0 0.0
        %521 = vmatpush2.msra.mxu0 %v457
        %522 = vmatprep.subr.mxu0 0.0
        %523 = vmatpush2.msra.mxu0 %v456
        %524 = vmatprep.subr.mxu0 0.0
        %525 = vmatpush2.msra.mxu0 %v455
        %526 = vmatprep.subr.mxu0 0.0
        %527 = vmatpush2.msra.mxu0 %v454
        %528 = vmatprep.subr.mxu0 0.0
        %529 = vmatpush2.msra.mxu0 %v453
        %530 = vmatprep.subr.mxu0 0.0
        %531 = vmatpush2.msra.mxu0 %v452
        %532 = vmatprep.mubr.f32.mxu0 %v434
        %533 = vmatmul.mubr.f32.gmra.mxu0 %v433
        %v534 = vpop.f32.mrf.mxu0
        %v535 = vadd.f32 0.0, %v534
        %v536 = vpop.f32.mrf.mxu0
        %537 = vdwg.mxu0
        %v538 = vadd.f32 %v429, %v535
        %s539 = scalar_lea.vmem %s195, 48 [#allocation2]
        %v540 = vld [vmem:[%s539] sm:$0xff]
        %v541 = vld [vmem:[%s539 + $0x8] sm:$0xff]
        %s542 = scalar_lea.vmem [#allocation5], 768
        %v543 = vld [vmem:[%s542] sm:$0xff]
        %v544 = vld [vmem:[%s542 + $0x8] sm:$0xff]
        %v545 = vld [vmem:[%s542 + $0x10] sm:$0xff]
        %v546 = vld [vmem:[%s542 + $0x18] sm:$0xff]
        %v547 = vld [vmem:[%s542 + $0x20] sm:$0xff]
        %v548 = vld [vmem:[%s542 + $0x28] sm:$0xff]
        %v549 = vld [vmem:[%s542 + $0x30] sm:$0xff]
        %v550 = vld [vmem:[%s542 + $0x38] sm:$0xff]
        %v551 = vld [vmem:[%s542 + $0x40] sm:$0xff]
        %v552 = vld [vmem:[%s542 + $0x48] sm:$0xff]
        %v553 = vld [vmem:[%s542 + $0x50] sm:$0xff]
        %v554 = vld [vmem:[%s542 + $0x58] sm:$0xff]
        %v555 = vld [vmem:[%s542 + $0x60] sm:$0xff]
        %v556 = vld [vmem:[%s542 + $0x68] sm:$0xff]
        %v557 = vld [vmem:[%s542 + $0x70] sm:$0xff]
        %v558 = vld [vmem:[%s542 + $0x78] sm:$0xff]
        %v559 = vld [vmem:[%s542 + $0x80] sm:$0xff]
        %v560 = vld [vmem:[%s542 + $0x88] sm:$0xff]
        %v561 = vld [vmem:[%s542 + $0x90] sm:$0xff]
        %v562 = vld [vmem:[%s542 + $0x98] sm:$0xff]
        %v563 = vld [vmem:[%s542 + $0xa0] sm:$0xff]
        %v564 = vld [vmem:[%s542 + $0xa8] sm:$0xff]
        %v565 = vld [vmem:[%s542 + $0xb0] sm:$0xff]
        %v566 = vld [vmem:[%s542 + $0xb8] sm:$0xff]
        %v567 = vld [vmem:[%s542 + $0xc0] sm:$0xff]
        %v568 = vld [vmem:[%s542 + $0xc8] sm:$0xff]
        %v569 = vld [vmem:[%s542 + $0xd0] sm:$0xff]
        %v570 = vld [vmem:[%s542 + $0xd8] sm:$0xff]
        %v571 = vld [vmem:[%s542 + $0xe0] sm:$0xff]
        %v572 = vld [vmem:[%s542 + $0xe8] sm:$0xff]
        %v573 = vld [vmem:[%s542 + $0xf0] sm:$0xff]
        %v574 = vld [vmem:[%s542 + $0xf8] sm:$0xff]
        %575 = vmatprep.subr.mxu0 0.0
        %576 = vmatpush1.msra.mxu0 %v558
        %577 = vmatprep.subr.mxu0 0.0
        %578 = vmatpush1.msra.mxu0 %v557
        %579 = vmatprep.subr.mxu0 0.0
        %580 = vmatpush1.msra.mxu0 %v556
        %581 = vmatprep.subr.mxu0 0.0
        %582 = vmatpush1.msra.mxu0 %v555
        %583 = vmatprep.subr.mxu0 0.0
        %584 = vmatpush1.msra.mxu0 %v554
        %585 = vmatprep.subr.mxu0 0.0
        %586 = vmatpush1.msra.mxu0 %v553
        %587 = vmatprep.subr.mxu0 0.0
        %588 = vmatpush1.msra.mxu0 %v552
        %589 = vmatprep.subr.mxu0 0.0
        %590 = vmatpush1.msra.mxu0 %v551
        %591 = vmatprep.subr.mxu0 0.0
        %592 = vmatpush1.msra.mxu0 %v550
        %593 = vmatprep.subr.mxu0 0.0
        %594 = vmatpush1.msra.mxu0 %v549
        %595 = vmatprep.subr.mxu0 0.0
        %596 = vmatpush1.msra.mxu0 %v548
        %597 = vmatprep.subr.mxu0 0.0
        %598 = vmatpush1.msra.mxu0 %v547
        %599 = vmatprep.subr.mxu0 0.0
        %600 = vmatpush1.msra.mxu0 %v546
        %601 = vmatprep.subr.mxu0 0.0
        %602 = vmatpush1.msra.mxu0 %v545
        %603 = vmatprep.subr.mxu0 0.0
        %604 = vmatpush1.msra.mxu0 %v544
        %605 = vmatprep.subr.mxu0 0.0
        %606 = vmatpush1.msra.mxu0 %v543
        %607 = vmatprep.subr.mxu0 0.0
        %608 = vmatpush2.msra.mxu0 %v574
        %609 = vmatprep.subr.mxu0 0.0
        %610 = vmatpush2.msra.mxu0 %v573
        %611 = vmatprep.subr.mxu0 0.0
        %612 = vmatpush2.msra.mxu0 %v572
        %613 = vmatprep.subr.mxu0 0.0
        %614 = vmatpush2.msra.mxu0 %v571
        %615 = vmatprep.subr.mxu0 0.0
        %616 = vmatpush2.msra.mxu0 %v570
        %617 = vmatprep.subr.mxu0 0.0
        %618 = vmatpush2.msra.mxu0 %v569
        %619 = vmatprep.subr.mxu0 0.0
        %620 = vmatpush2.msra.mxu0 %v568
        %621 = vmatprep.subr.mxu0 0.0
        %622 = vmatpush2.msra.mxu0 %v567
        %623 = vmatprep.subr.mxu0 0.0
        %624 = vmatpush2.msra.mxu0 %v566
        %625 = vmatprep.subr.mxu0 0.0
        %626 = vmatpush2.msra.mxu0 %v565
        %627 = vmatprep.subr.mxu0 0.0
        %628 = vmatpush2.msra.mxu0 %v564
        %629 = vmatprep.subr.mxu0 0.0
        %630 = vmatpush2.msra.mxu0 %v563
        %631 = vmatprep.subr.mxu0 0.0
        %632 = vmatpush2.msra.mxu0 %v562
        %633 = vmatprep.subr.mxu0 0.0
        %634 = vmatpush2.msra.mxu0 %v561
        %635 = vmatprep.subr.mxu0 0.0
        %636 = vmatpush2.msra.mxu0 %v560
        %637 = vmatprep.subr.mxu0 0.0
        %638 = vmatpush2.msra.mxu0 %v559
        %639 = vmatprep.mubr.f32.mxu0 %v541
        %640 = vmatmul.mubr.f32.gmra.mxu0 %v540
        %v641 = vpop.f32.mrf.mxu0
        %v642 = vadd.f32 0.0, %v641
        %v643 = vpop.f32.mrf.mxu0
        %644 = vdwg.mxu0
        %v645 = vadd.f32 %v538, %v642
        %v646 = vld [vmem:[%s2] sm:$0x1]
        %v648 = vlaneseq
        %v649 = vshrl.u32 %v648, 7
        %v650 = vsub.s32 0, %v649
        %v651 = vrot.slane %v646, %v650
        %v653 = vadd.f32 %v645, %v651
        %654 = vst [vmem:[%s221] sm:$0xff] %v653
        %s655 = sand.u32 %s113, 1
        %s656 = scalar_lea.sflag [#allocation4], %s655
        %s657 = sand.u32 %s113, 1
        %s658 = smul.addr %s657, 8
        %s659 = scalar_lea.vmem [#allocation7], %s658
        // Predicated region
        $region41: #{tpu_custom_call.1} parent=31 // pred_check
          %p660 = pneg %p123
        $region42: #{tpu_custom_call.1} parent=31 // pred_check_branch
          %662 = sbr.rel (%p660) target = $region44
        $region43: #{tpu_custom_call.1} parent=31 // pred_region
          %s664 = ssub.s32 128, 128
          %665 = vsyncadd %s656, %s664
          %s666 = sadd.s32 %s26, %s25
          %s667 = smul.addr %s666, 128
          %s668 = scalar_lea.hbm %s3, %s667
          %s670 = sshll.u32 %s659, 4
          %s671 = int_to_ptr.vmem [resolvable:$true] %s670
          %673 = dma.vmem_to_hbm [thread:$0]  %s671, 128, %s668, %s656
        $region44: #{tpu_custom_call.1} parent=31 // pred_fallthru
          _
      $region32: #{tpu_custom_call.1} parent=5 // pred_fallthru
        _
      %p674 = scmp.le.s32.totalorder 2, %s16
      // Predicated region
      $region45: #{tpu_custom_call.1} parent=5 // pred_check
        %p675 = pneg %p674
      $region46: #{tpu_custom_call.1} parent=5 // pred_check_branch
        %677 = sbr.rel (%p675) target = $region48
      $region47: #{tpu_custom_call.1} parent=5 // pred_region
        %s678 = ssub.s32 %s16, 2
        // Predicated region
        $region49: #{tpu_custom_call.1} parent=47 // pred_check
          %p679 = pneg %p129
        $region50: #{tpu_custom_call.1} parent=47 // pred_check_branch
          %681 = sbr.rel (%p679) target = $region52
        $region51: #{tpu_custom_call.1} parent=47 // pred_region
          %s682 = sand.u32 %s114, 1
          %s683 = scalar_lea.sflag [#allocation4], %s682
          %s684 = sand.u32 %s114, 1
          %s685 = smul.addr %s684, 8
          %s686 = scalar_lea.vmem [#allocation7], %s685
          %687 = dma.done %s683, 128
        $region52: #{tpu_custom_call.1} parent=47 // pred_fallthru
          _
      $region48: #{tpu_custom_call.1} parent=5 // pred_fallthru
        _
    $region6: #{tpu_custom_call.1} parent=1 // loop_footer
      %s20 = sadd.s32 1, %s16
    $region7: #{tpu_custom_call.1} parent=1 // loop_footer_branch
      %15 = sbr.rel target = $region3
    $region8: #{tpu_custom_call.1} parent=1 // loop_exit
      _
    %688 = vsyncpa [#allocation3], 1
    %s689 = scalar_lea.sflag [#allocation3], 1
    %690 = vsyncpa %s689, 1
    %691 = vsyncpa [#allocation6], 1
    %692 = vsyncpa [#allocation4], 1
    %s693 = scalar_lea.sflag [#allocation4], 1
    %694 = vsyncpa %s693, 1

</llo_original>
